<compile_context>
chip_gen: v7x
topology: tpu7x:2x2x1
jax: 0.10.0
libtpu: 0.0.40
codegen_flags: <defaults>
</compile_context>

<pallas_src>
import jax
import jax.numpy as jnp
from jax import lax
from jax.experimental import pallas as pl
from jax.experimental.pallas import tpu as pltpu

_NEG_LARGE = -1.0e30  # "minus infinity" that never yields (-inf) - (-inf) = NaN


def _round_up(x, m):
    return (x + m - 1) // m * m


def _attention_walk_kernel(h_ref, wg_ref, mask_ref,
                           m_out, l_out, z_out,
                           m_sc, l_sc, z_sc):
    k = pl.program_id(1)  # reduction step within this shard

    @pl.when(k == 0)
    def _():
        m_sc[...] = jnp.full(m_sc.shape, _NEG_LARGE, jnp.float32)
        l_sc[...] = jnp.zeros(l_sc.shape, jnp.float32)
        z_sc[...] = jnp.zeros(z_sc.shape, jnp.float32)

    h = h_ref[...]                                              # (tile_n, D_in)
    # Gate logits: column 0 of the 128-lane-padded gate weight (one MXU pass),
    # plus the streamed 0 / -1e30 pad mask (one skinny VPU add per tile).
    g = jnp.dot(h, wg_ref[...], preferred_element_type=jnp.float32)[:, 0:1]
    g = g + mask_ref[...]                                       # (tile_n, 1)

    # Online softmax over the node axis, fp32 throughout.
    m_prev = m_sc[...]                                          # (1, 1)
    m_new = jnp.maximum(m_prev, jnp.max(g, keepdims=True))      # (1, 1)
    alpha = jnp.exp(m_prev - m_new)                             # (1, 1)
    p = jnp.exp(g - m_new)                                      # (tile_n, 1)

    l_sc[...] = alpha * l_sc[...] + jnp.sum(p, keepdims=True)
    # Weighted node reduction as an MXU contraction over the node axis:
    # (tile_n, 1)^T @ (tile_n, D_in) -> (1, D_in).
    z_sc[...] = alpha * z_sc[...] + lax.dot_general(
        p.astype(h.dtype), h,
        dimension_numbers=(((0,), (0,)), ((), ())),
        preferred_element_type=jnp.float32)
    m_sc[...] = m_new

    @pl.when(k == pl.num_programs(1) - 1)
    def _():
        m_out[...] = m_sc[...].reshape(m_out.shape)
        l_out[...] = l_sc[...].reshape(l_out.shape)
        z_out[...] = z_sc[...].reshape(z_out.shape)


def _default_tile_n(d_in, itemsize):
    # ~2 MiB of (lane-padded) h per pipeline buffer: big enough to amortize the
    # ~0.35 us per-grid-step overhead, small enough that h (x2 buffers) + the
    # mask column (x2) + gate-matmul intermediates stay well inside the default
    # 32 MiB scoped VMEM on every generation (incl. v7x's 64 MiB physical).
    d_pad = _round_up(d_in, 128)  # lane padding of the h block in VMEM
    t = (2 * 1024 * 1024) // (d_pad * itemsize)
    return int(max(256, min(8192, (t // 256) * 256)))


def attention_walk(h, w_gate, b_gate, w_feat, b_feat, *,
                   tile_n=None, num_shards=2):
    """Softmax attention pooling over dim 0 (AttentionWalk.forward).

    h: (N, D_in); w_gate: (D_in, 1); b_gate [exact no-op: softmax over dim 0 is
    shift invariant]; w_feat: (D_in, D_out); b_feat: (D_out,) or (1, D_out).
    Returns (D_out,) float32.
    """
    N, D_in = h.shape
    D_out = w_feat.shape[1]
    if N < 1:
        raise ValueError("attention_walk needs at least one row")
    del b_gate  # exact no-op under softmax(dim=0)

    itemsize = jnp.dtype(h.dtype).itemsize
    if tile_n is None:
        tile_n = _default_tile_n(D_in, itemsize)
    tile_n = _round_up(max(int(tile_n), 256), 256)  # 256-row granule (MXU / bf16 pack)
    tile_n = min(tile_n, _round_up(N, 256))

    grid_n = pl.cdiv(N, tile_n)
    num_shards = max(1, min(int(num_shards), grid_n))
    steps = pl.cdiv(grid_n, num_shards)
    n_pad = num_shards * steps * tile_n

    if n_pad != N:
        h = jnp.pad(h, ((0, n_pad - N), (0, 0)))
    # Additive pad mask: 0 for real rows, -1e30 for padded rows. Streamed as a
    # skinny column so the kernel pays ONE add per tile instead of
    # iota + compare + select on every tile.
    mask = jnp.where(jnp.arange(n_pad, dtype=jnp.int32) < N,
                     jnp.float32(0.0), jnp.float32(_NEG_LARGE)).reshape(n_pad, 1)

    # Gate weight, lane-padded to 128 and cast to h's dtype for the MXU
    # (bf16 operands are fine on v5e/v6e/v7x; accumulation stays fp32).
    wg = jnp.zeros((D_in, 128), h.dtype).at[:, 0:1].set(w_gate.astype(h.dtype))

    m_parts, l_parts, z_parts = pl.pallas_call(
        _attention_walk_kernel,
        out_shape=(
            jax.ShapeDtypeStruct((num_shards, 1, 1), jnp.float32),
            jax.ShapeDtypeStruct((num_shards, 1, 1), jnp.float32),
            jax.ShapeDtypeStruct((num_shards, 1, D_in), jnp.float32),
        ),
        grid_spec=pltpu.PrefetchScalarGridSpec(
            num_scalar_prefetch=0,
            grid=(num_shards, steps),
            in_specs=[
                # h: one node tile per (shard, step) -> pipelined HBM DMA.
                pl.BlockSpec((tile_n, D_in), lambda s, k: (s * steps + k, 0)),
                # gate weight: same block every step -> stays resident in VMEM.
                pl.BlockSpec((D_in, 128), lambda s, k: (0, 0)),
                # pad-mask column, follows the h tiles.
                pl.BlockSpec((tile_n, 1), lambda s, k: (s * steps + k, 0)),
            ],
            out_specs=(
                pl.BlockSpec((1, 1, 1), lambda s, k: (s, 0, 0)),
                pl.BlockSpec((1, 1, 1), lambda s, k: (s, 0, 0)),
                pl.BlockSpec((1, 1, D_in), lambda s, k: (s, 0, 0)),
            ),
            scratch_shapes=[
                pltpu.VMEM((1, 1), jnp.float32),      # running max m
                pltpu.VMEM((1, 1), jnp.float32),      # running denom l
                pltpu.VMEM((1, D_in), jnp.float32),   # running weighted h-sum z
            ],
        ),
        compiler_params=pltpu.CompilerParams(
            # Shards are independent ("parallel" -> split across TensorCores on
            # v7x); the step axis is the sequential online-softmax reduction.
            dimension_semantics=("parallel", "arbitrary")),
    )(h, wg, mask)

    # Merge the per-shard online-softmax partials (exact, O(num_shards * D_in)).
    m_parts = m_parts[:, 0, 0]                       # (S,)
    l_parts = l_parts[:, 0, 0]                       # (S,)
    z_parts = z_parts[:, 0, :]                       # (S, D_in)
    m_tot = jnp.max(m_parts)
    scale = jnp.exp(m_parts - m_tot)                 # (S,)
    l_tot = jnp.sum(l_parts * scale)
    z_tot = jnp.sum(z_parts * scale[:, None], axis=0)           # (D_in,)
    pooled = z_tot / l_tot                           # exact divide (no approx recip)

    # D_out projection + b_feat, hoisted out of the kernel (exact identities).
    return pooled @ w_feat.astype(jnp.float32) + b_feat.reshape(-1).astype(jnp.float32)


def _reference(h, w_gate, b_gate, w_feat, b_feat):
    g = h @ w_gate + b_gate.reshape(1, 1)            # (N, 1)
    f = h @ w_feat + b_feat.reshape(1, -1)           # (N, D_out)
    g_softmax = jax.nn.softmax(g, axis=0)            # softmax over dim=0
    return jnp.sum(g_softmax * f, axis=0)            # (D_out,)


if __name__ == "__main__":
    key = jax.random.PRNGKey(0)
    keys = jax.random.split(key, 10)

    # Case 1: small shapes consistent with the module (single tile, one shard).
    N, D_in, D_out = 8, 32, 32
    h = jax.random.normal(keys[0], (N, D_in), dtype=jnp.float32)
    w_gate = jax.random.normal(keys[1], (D_in, 1), dtype=jnp.float32) * 0.1
    b_gate = jax.random.normal(keys[2], (1, 1), dtype=jnp.float32) * 0.1
    w_feat = jax.random.normal(keys[3], (D_in, D_out), dtype=jnp.float32) * 0.1
    b_feat = jax.random.normal(keys[4], (1, D_out), dtype=jnp.float32) * 0.1

    out = jax.block_until_ready(attention_walk(h, w_gate, b_gate, w_feat, b_feat))
    ref = _reference(h, w_gate, b_gate, w_feat, b_feat)
    assert out.shape == (D_out,)
    assert jnp.allclose(out, ref, atol=2e-4, rtol=2e-4), (out, ref)

    # Case 2: multi-tile, 2-shard node axis with a ragged tail (exercises the
    # online-softmax accumulator, the streamed pad mask, and the shard merge).
    N2, D_in2, D_out2 = 600, 48, 24
    h2 = jax.random.normal(keys[5], (N2, D_in2), dtype=jnp.float32)
    w_gate2 = jax.random.normal(keys[6], (D_in2, 1), dtype=jnp.float32) * 0.1
    b_gate2 = jax.random.normal(keys[7], (1, 1), dtype=jnp.float32) * 0.1
    w_feat2 = jax.random.normal(keys[8], (D_in2, D_out2), dtype=jnp.float32) * 0.1
    b_feat2 = jax.random.normal(keys[9], (1, D_out2), dtype=jnp.float32) * 0.1

    out2 = jax.block_until_ready(
        attention_walk(h2, w_gate2, b_gate2, w_feat2, b_feat2,
                       tile_n=256, num_shards=2))
    ref2 = _reference(h2, w_gate2, b_gate2, w_feat2, b_feat2)
    assert out2.shape == (D_out2,)
    assert jnp.allclose(out2, ref2, atol=2e-4, rtol=2e-4), (out2, ref2)

    # TODO(synk): the PyTorch forward's print()/exit() debug side-effects are
    # intentionally not reproduced; only the math (gate, softmax over dim=0,
    # weighted sum, feat projection) is.
    print("KERNEL_OK")
</pallas_src>

<mosaic_0001>
module attributes {stable_mosaic.version = 11 : i64} {
  func.func @_attention_walk_kernel(%arg0: i32, %arg1: i32, %arg2: memref<256x32xf32, #tpu.memory_space<vmem>>, %arg3: memref<32x128xf32, #tpu.memory_space<vmem>>, %arg4: memref<256x1xf32, #tpu.memory_space<vmem>>, %arg5: memref<1x1x1xf32, #tpu.memory_space<vmem>>, %arg6: memref<1x1x1xf32, #tpu.memory_space<vmem>>, %arg7: memref<1x1x32xf32, #tpu.memory_space<vmem>>, %arg8: memref<1x1xf32, #tpu.memory_space<vmem>>, %arg9: memref<1x1xf32, #tpu.memory_space<vmem>>, %arg10: memref<1x32xf32, #tpu.memory_space<vmem>>) attributes {dimension_semantics = [#tpu.dimension_semantics<parallel>, #tpu.dimension_semantics<arbitrary>], iteration_bounds = array<i64: 1, 1>, scalar_prefetch = 0 : i64, scratch_operands = 3 : i64, tpu.core_type = #tpu.core_type<tc>, window_params = [{transform_indices = @transform_0, window_bounds = array<i64: 256, 32>}, {pipeline_mode = #tpu.pipeline_mode<synchronous>, transform_indices = @transform_1, window_bounds = array<i64: 32, 128>}, {transform_indices = @transform_2, window_bounds = array<i64: 256, 1>}, {transform_indices = @transform_3, window_bounds = array<i64: 1, 1, 1>}, {transform_indices = @transform_4, window_bounds = array<i64: 1, 1, 1>}, {transform_indices = @transform_5, window_bounds = array<i64: 1, 1, 32>}]} {
    %c0_i32 = arith.constant 0 : i32
    %0 = arith.cmpi eq, %arg1, %c0_i32 : i32
    %1 = arith.extui %0 : i1 to i32
    %c0_i32_0 = arith.constant 0 : i32
    %2 = arith.cmpi ne, %1, %c0_i32_0 : i32
    scf.if %2 {
      %cst_23 = arith.constant -1.000000e+30 : f32
      %40 = vector.broadcast %cst_23 : f32 to vector<1x1xf32>
      %c0_24 = arith.constant 0 : index
      %c0_25 = arith.constant 0 : index
      %41 = vector.load %arg8[%c0_24, %c0_25] : memref<1x1xf32, #tpu.memory_space<vmem>>, vector<1x1xf32>
      tpu.vector_store %arg8[%c0_24, %c0_25], %40 {strides = array<i32>} : memref<1x1xf32, #tpu.memory_space<vmem>>, vector<1x1xf32>,
      %cst_26 = arith.constant 0.000000e+00 : f32
      %42 = vector.broadcast %cst_26 : f32 to vector<1x1xf32>
      %c0_27 = arith.constant 0 : index
      %c0_28 = arith.constant 0 : index
      %43 = vector.load %arg9[%c0_27, %c0_28] : memref<1x1xf32, #tpu.memory_space<vmem>>, vector<1x1xf32>
      tpu.vector_store %arg9[%c0_27, %c0_28], %42 {strides = array<i32>} : memref<1x1xf32, #tpu.memory_space<vmem>>, vector<1x1xf32>,
      %cst_29 = arith.constant 0.000000e+00 : f32
      %44 = vector.broadcast %cst_29 : f32 to vector<1x32xf32>
      %c0_30 = arith.constant 0 : index
      %c0_31 = arith.constant 0 : index
      %45 = vector.load %arg10[%c0_30, %c0_31] : memref<1x32xf32, #tpu.memory_space<vmem>>, vector<1x32xf32>
      tpu.vector_store %arg10[%c0_30, %c0_31], %44 {strides = array<i32>} : memref<1x32xf32, #tpu.memory_space<vmem>>, vector<1x32xf32>,
    } else {
    }
    %c0 = arith.constant 0 : index
    %c0_1 = arith.constant 0 : index
    %3 = vector.load %arg2[%c0, %c0_1] : memref<256x32xf32, #tpu.memory_space<vmem>>, vector<256x32xf32>
    %c0_2 = arith.constant 0 : index
    %c0_3 = arith.constant 0 : index
    %4 = vector.load %arg3[%c0_2, %c0_3] : memref<32x128xf32, #tpu.memory_space<vmem>>, vector<32x128xf32>
    %cst = arith.constant dense<0.000000e+00> : vector<256x128xf32>
    %5 = tpu.matmul %3, %4, %cst {dimension_numbers = #tpu.dot_dimension_numbers<[1], [0], [0], [1], [0, 0, 1, 1], [], []>} : vector<256x32xf32>, vector<32x128xf32>, vector<256x128xf32> -> vector<256x128xf32>
    %6 = vector.extract_strided_slice %5 {offsets = [0, 0], sizes = [256, 1], strides = [1, 1]} : vector<256x128xf32> to vector<256x1xf32>
    %c0_4 = arith.constant 0 : index
    %c0_5 = arith.constant 0 : index
    %7 = vector.load %arg4[%c0_4, %c0_5] : memref<256x1xf32, #tpu.memory_space<vmem>>, vector<256x1xf32>
    %8 = arith.addf %6, %7 : vector<256x1xf32>
    %c0_6 = arith.constant 0 : index
    %c0_7 = arith.constant 0 : index
    %9 = vector.load %arg8[%c0_6, %c0_7] : memref<1x1xf32, #tpu.memory_space<vmem>>, vector<1x1xf32>
    %10 = vector.shape_cast %8 : vector<256x1xf32> to vector<1x256x1xf32>
    %cst_8 = arith.constant dense<0xFF800000> : vector<1xf32>
    %11 = vector.multi_reduction <maximumf>, %10, %cst_8 [1, 2] : vector<1x256x1xf32> to vector<1xf32>
    %12 = vector.shape_cast %11 : vector<1xf32> to vector<1x1x1xf32>
    %13 = vector.extract %12[0, 0, 0] : f32 from vector<1x1x1xf32>
    %14 = vector.broadcast %13 : f32 to vector<1x1xf32>
    %15 = arith.maximumf %9, %14 : vector<1x1xf32>
    %16 = arith.subf %9, %15 : vector<1x1xf32>
    %17 = math.exp %16 : vector<1x1xf32>
    %18 = vector.broadcast %15 : vector<1x1xf32> to vector<256x1xf32>
    %19 = arith.subf %8, %18 : vector<256x1xf32>
    %20 = math.exp %19 : vector<256x1xf32>
    %c0_9 = arith.constant 0 : index
    %c0_10 = arith.constant 0 : index
    %21 = vector.load %arg9[%c0_9, %c0_10] : memref<1x1xf32, #tpu.memory_space<vmem>>, vector<1x1xf32>
    %22 = arith.mulf %17, %21 : vector<1x1xf32>
    %23 = vector.shape_cast %20 : vector<256x1xf32> to vector<1x256x1xf32>
    %cst_11 = arith.constant dense<0.000000e+00> : vector<1xf32>
    %24 = vector.multi_reduction <add>, %23, %cst_11 [1, 2] : vector<1x256x1xf32> to vector<1xf32>
    %25 = vector.shape_cast %24 : vector<1xf32> to vector<1x1x1xf32>
    %26 = vector.extract %25[0, 0, 0] : f32 from vector<1x1x1xf32>
    %27 = vector.broadcast %26 : f32 to vector<1x1xf32>
    %28 = arith.addf %22, %27 : vector<1x1xf32>
    %c0_12 = arith.constant 0 : index
    %c0_13 = arith.constant 0 : index
    %29 = vector.load %arg9[%c0_12, %c0_13] : memref<1x1xf32, #tpu.memory_space<vmem>>, vector<1x1xf32>
    tpu.vector_store %arg9[%c0_12, %c0_13], %28 {strides = array<i32>} : memref<1x1xf32, #tpu.memory_space<vmem>>, vector<1x1xf32>,
    %c0_14 = arith.constant 0 : index
    %c0_15 = arith.constant 0 : index
    %30 = vector.load %arg10[%c0_14, %c0_15] : memref<1x32xf32, #tpu.memory_space<vmem>>, vector<1x32xf32>
    %31 = vector.broadcast %17 : vector<1x1xf32> to vector<1x32xf32>
    %32 = arith.mulf %31, %30 : vector<1x32xf32>
    %cst_16 = arith.constant dense<0.000000e+00> : vector<1x32xf32>
    %33 = tpu.matmul %20, %3, %cst_16 {dimension_numbers = #tpu.dot_dimension_numbers<[0], [0], [1], [1], [0, 1, 1, 1], [], []>} : vector<256x1xf32>, vector<256x32xf32>, vector<1x32xf32> -> vector<1x32xf32>
    %34 = arith.addf %32, %33 : vector<1x32xf32>
    %c0_17 = arith.constant 0 : index
    %c0_18 = arith.constant 0 : index
    %35 = vector.load %arg10[%c0_17, %c0_18] : memref<1x32xf32, #tpu.memory_space<vmem>>, vector<1x32xf32>
    tpu.vector_store %arg10[%c0_17, %c0_18], %34 {strides = array<i32>} : memref<1x32xf32, #tpu.memory_space<vmem>>, vector<1x32xf32>,
    %c0_19 = arith.constant 0 : index
    %c0_20 = arith.constant 0 : index
    %36 = vector.load %arg8[%c0_19, %c0_20] : memref<1x1xf32, #tpu.memory_space<vmem>>, vector<1x1xf32>
    tpu.vector_store %arg8[%c0_19, %c0_20], %15 {strides = array<i32>} : memref<1x1xf32, #tpu.memory_space<vmem>>, vector<1x1xf32>,
    %c0_i32_21 = arith.constant 0 : i32
    %37 = arith.cmpi eq, %arg1, %c0_i32_21 : i32
    %38 = arith.extui %37 : i1 to i32
    %c0_i32_22 = arith.constant 0 : i32
    %39 = arith.cmpi ne, %38, %c0_i32_22 : i32
    scf.if %39 {
      %c0_23 = arith.constant 0 : index
      %c0_24 = arith.constant 0 : index
      %40 = vector.load %arg8[%c0_23, %c0_24] : memref<1x1xf32, #tpu.memory_space<vmem>>, vector<1x1xf32>
      %41 = vector.shape_cast %40 : vector<1x1xf32> to vector<1x1x1xf32>
      %c0_25 = arith.constant 0 : index
      %c0_26 = arith.constant 0 : index
      %c0_27 = arith.constant 0 : index
      %42 = vector.load %arg5[%c0_25, %c0_26, %c0_27] : memref<1x1x1xf32, #tpu.memory_space<vmem>>, vector<1x1x1xf32>
      tpu.vector_store %arg5[%c0_25, %c0_26, %c0_27], %41 {strides = array<i32>} : memref<1x1x1xf32, #tpu.memory_space<vmem>>, vector<1x1x1xf32>,
      %c0_28 = arith.constant 0 : index
      %c0_29 = arith.constant 0 : index
      %43 = vector.load %arg9[%c0_28, %c0_29] : memref<1x1xf32, #tpu.memory_space<vmem>>, vector<1x1xf32>
      %44 = vector.shape_cast %43 : vector<1x1xf32> to vector<1x1x1xf32>
      %c0_30 = arith.constant 0 : index
      %c0_31 = arith.constant 0 : index
      %c0_32 = arith.constant 0 : index
      %45 = vector.load %arg6[%c0_30, %c0_31, %c0_32] : memref<1x1x1xf32, #tpu.memory_space<vmem>>, vector<1x1x1xf32>
      tpu.vector_store %arg6[%c0_30, %c0_31, %c0_32], %44 {strides = array<i32>} : memref<1x1x1xf32, #tpu.memory_space<vmem>>, vector<1x1x1xf32>,
      %c0_33 = arith.constant 0 : index
      %c0_34 = arith.constant 0 : index
      %46 = vector.load %arg10[%c0_33, %c0_34] : memref<1x32xf32, #tpu.memory_space<vmem>>, vector<1x32xf32>
      %47 = vector.shape_cast %46 : vector<1x32xf32> to vector<1x1x32xf32>
      %c0_35 = arith.constant 0 : index
      %c0_36 = arith.constant 0 : index
      %c0_37 = arith.constant 0 : index
      %48 = vector.load %arg7[%c0_35, %c0_36, %c0_37] : memref<1x1x32xf32, #tpu.memory_space<vmem>>, vector<1x1x32xf32>
      tpu.vector_store %arg7[%c0_35, %c0_36, %c0_37], %47 {strides = array<i32>} : memref<1x1x32xf32, #tpu.memory_space<vmem>>, vector<1x1x32xf32>,
    } else {
    }
    return
  }
  func.func @transform_0(%arg0: i32, %arg1: i32) -> (i32, i32) {
    %c1_i32 = arith.constant 1 : i32
    %0 = arith.muli %arg0, %c1_i32 : i32
    %1 = arith.addi %0, %arg1 : i32
    %c0_i32 = arith.constant 0 : i32
    %c0_i32_0 = arith.constant 0 : i32
    return %1, %c0_i32 : i32, i32
  }
  func.func @transform_1(%arg0: i32, %arg1: i32) -> (i32, i32) {
    %c0_i32 = arith.constant 0 : i32
    %c0_i32_0 = arith.constant 0 : i32
    %c0_i32_1 = arith.constant 0 : i32
    return %c0_i32, %c0_i32_0 : i32, i32
  }
  func.func @transform_2(%arg0: i32, %arg1: i32) -> (i32, i32) {
    %c1_i32 = arith.constant 1 : i32
    %0 = arith.muli %arg0, %c1_i32 : i32
    %1 = arith.addi %0, %arg1 : i32
    %c0_i32 = arith.constant 0 : i32
    %c0_i32_0 = arith.constant 0 : i32
    return %1, %c0_i32 : i32, i32
  }
  func.func @transform_3(%arg0: i32, %arg1: i32) -> (i32, i32, i32) {
    %c0_i32 = arith.constant 0 : i32
    %c0_i32_0 = arith.constant 0 : i32
    %c0_i32_1 = arith.constant 0 : i32
    return %arg0, %c0_i32, %c0_i32_0 : i32, i32, i32
  }
  func.func @transform_4(%arg0: i32, %arg1: i32) -> (i32, i32, i32) {
    %c0_i32 = arith.constant 0 : i32
    %c0_i32_0 = arith.constant 0 : i32
    %c0_i32_1 = arith.constant 0 : i32
    return %arg0, %c0_i32, %c0_i32_0 : i32, i32, i32
  }
  func.func @transform_5(%arg0: i32, %arg1: i32) -> (i32, i32, i32) {
    %c0_i32 = arith.constant 0 : i32
    %c0_i32_0 = arith.constant 0 : i32
    %c0_i32_1 = arith.constant 0 : i32
    return %arg0, %c0_i32, %c0_i32_0 : i32, i32, i32
  }
}

</mosaic_0001>

<llo_original>
// kernel: tpu_custom_call.1
$region0: #{tpu_custom_call.1}
  #allocation0 [shape = 'u32[]', space=smem, size = 0x4, offset = 0x4, fixed_abs, tag = 'smem constant byte address 0x4 - core index']
  #allocation1 [shape = 'u32[144,128]{1,0:T(1,128)}', space=vmem, size = 0x12000, scoped, tag = 'internal scratch']
  #allocation2 [shape = 'f32[1,1]{1,0:T(1,128)}', space=vmem, size = 0x200, scoped, tag = 'scratch operand']
  #allocation3 [shape = 'f32[1,1]{1,0:T(1,128)}', space=vmem, size = 0x200, scoped, tag = 'scratch operand']
  #allocation4 [shape = 'f32[1,32]{1,0:T(1,128)}', space=vmem, size = 0x200, scoped, tag = 'scratch operand']
  %s0 = inlined_call_operand.vmem [shape: f32[256,32], index: 0, kind: input, shape index: {}]
  %s1 = inlined_call_operand.vmem [shape: f32[32,128], index: 1, kind: input, shape index: {}]
  %s2 = inlined_call_operand.vmem [shape: f32[256,1], index: 2, kind: input, shape index: {}]
  %s3 = inlined_call_operand.hbm [shape: f32[1,1,1], index: 3, kind: output, shape index: {0}]
  %s4 = inlined_call_operand.hbm [shape: f32[1,1,1], index: 4, kind: output, shape index: {1}]
  %s5 = inlined_call_operand.hbm [shape: f32[1,1,32], index: 5, kind: output, shape index: {2}]
  %6 = xla_tuple %s3, %s4, %s5
  %s7 = sld [smem:[#allocation0]]
  $region46: #{tpu_custom_call.1} parent=0
    _
  %s9 = ssub.s32 1, %s7
  %s10 = scalar_select 0, %s9, %s7
  $region1: #{tpu_custom_call.1} parent=0
    #allocation5 [shape = 'u8[512]{0}', space=vmem, size = 0x400, scoped, tag = 'output window, operand 0, single buffered']
    #allocation6 [shape = 's32[1]{0}', space=sflag, size = 0x4, scoped, tag = 'scoped memory for tpu_custom_call.1']
    #allocation7 [shape = 'u8[512]{0}', space=vmem, size = 0x400, scoped, tag = 'output window, operand 1, single buffered']
    #allocation8 [shape = 's32[1]{0}', space=sflag, size = 0x4, scoped, tag = 'scoped memory for tpu_custom_call.1']
    #allocation9 [shape = 'u8[512]{0}', space=vmem, size = 0x400, scoped, tag = 'output window, operand 2, single buffered']
    %11 = vsyncpa [#allocation6], 0
    %12 = vsyncpa [#allocation8], 0
    // Predicated region
    $region2: #{tpu_custom_call.1} parent=1 // pred_check
      _
    $region3: #{tpu_custom_call.1} parent=1 // pred_check_branch
      %14 = sbr.rel (0) target = $region5
    $region4: #{tpu_custom_call.1} parent=1 // pred_region
      %s15 = sadd.s32 0, 0
      %s16 = smul.u32 32, %s15
      %p17 = scmp.lt.s32.totalorder %s16, 31
      %s18 = scalar_select %p17, %s16, 31
      %s19 = smul.addr %s18, 8
      %s20 = scalar_lea.vmem %s0, %s19
      %s21 = sadd.s32 0, 0
      %s22 = smul.u32 32, %s21
    $region5: #{tpu_custom_call.1} parent=1 // pred_fallthru
      _
    // Predicated region
    $region6: #{tpu_custom_call.1} parent=1 // pred_check
      _
    $region7: #{tpu_custom_call.1} parent=1 // pred_check_branch
      %24 = sbr.rel (0) target = $region9
    $region8: #{tpu_custom_call.1} parent=1 // pred_region
      _
    $region9: #{tpu_custom_call.1} parent=1 // pred_fallthru
      _
    // Predicated region
    $region10: #{tpu_custom_call.1} parent=1 // pred_check
      _
    $region11: #{tpu_custom_call.1} parent=1 // pred_check_branch
      %26 = sbr.rel (0) target = $region13
    $region12: #{tpu_custom_call.1} parent=1 // pred_region
      %s27 = sadd.s32 0, 0
      %s28 = smul.u32 32, %s27
      %p29 = scmp.lt.s32.totalorder %s28, 31
      %s30 = scalar_select %p29, %s28, 31
      %s31 = smul.addr %s30, 8
      %s32 = scalar_lea.vmem %s2, %s31
      %s33 = sadd.s32 0, 0
      %s34 = smul.u32 32, %s33
    $region13: #{tpu_custom_call.1} parent=1 // pred_fallthru
      _
    %s35 = sadd.s32 0, 0
    %s36 = smul.u32 32, %s35
    %p37 = scmp.lt.s32.totalorder %s36, 31
    %s38 = scalar_select %p37, %s36, 31
    %s39 = smul.addr %s38, 8
    %s40 = scalar_lea.vmem %s0, %s39
    %s41 = sadd.s32 0, 0
    %s42 = smul.u32 32, %s41
    %p43 = scmp.lt.s32.totalorder %s42, 31
    %s44 = scalar_select %p43, %s42, 31
    %s45 = smul.addr %s44, 8
    %s46 = scalar_lea.vmem %s2, %s45
    %s47 = sadd.s32 0, 0
    %s48 = smul.u32 32, %s47
    %p49 = scmp.lt.s32.totalorder %s48, 31
    %s50 = scalar_select %p49, %s48, 31
    %s51 = smul.addr %s50, 8
    %s52 = scalar_lea.vmem %s0, %s51
    %s53 = sadd.s32 0, 0
    %s54 = smul.u32 32, %s53
    %s55 = sadd.s32 0, 0
    %s56 = smul.u32 32, %s55
    %p57 = scmp.lt.s32.totalorder %s56, 31
    %s58 = scalar_select %p57, %s56, 31
    %s59 = smul.addr %s58, 8
    %s60 = scalar_lea.vmem %s2, %s59
    %s61 = sadd.s32 0, 0
    %s62 = smul.u32 32, %s61
    %p63 = scmp.eq.s32.totalorder 0, 0
    // Predicated region
    $region14: #{tpu_custom_call.1} parent=1 // pred_check
      %p64 = pneg %p63
    $region15: #{tpu_custom_call.1} parent=1 // pred_check_branch
      %66 = sbr.rel (%p64) target = $region17
    $region16: #{tpu_custom_call.1} parent=1 // pred_region
      %vm67 = vcmask 0
      %68 = vst.msk [vmem:[#allocation2] sm:$0x1] %vm67, -1e+30
      %69 = vst.msk [vmem:[#allocation3] sm:$0x1] %vm67, 0.0
      %vm70 = vcmask 253952
      %71 = vst.msk [vmem:[#allocation4] sm:$0x1] %vm70, 0.0
    $region17: #{tpu_custom_call.1} parent=1 // pred_fallthru
      _
    %v72 = vld [vmem:[%s52] sm:$0xff]
    %v73 = vld [vmem:[%s52 + $0x8] sm:$0xff]
    %v74 = vld [vmem:[%s52 + $0x10] sm:$0xff]
    %v75 = vld [vmem:[%s52 + $0x18] sm:$0xff]
    %v76 = vld [vmem:[%s52 + $0x20] sm:$0xff]
    %v77 = vld [vmem:[%s52 + $0x28] sm:$0xff]
    %v78 = vld [vmem:[%s52 + $0x30] sm:$0xff]
    %v79 = vld [vmem:[%s52 + $0x38] sm:$0xff]
    %v80 = vld [vmem:[%s52 + $0x40] sm:$0xff]
    %v81 = vld [vmem:[%s52 + $0x48] sm:$0xff]
    %v82 = vld [vmem:[%s52 + $0x50] sm:$0xff]
    %v83 = vld [vmem:[%s52 + $0x58] sm:$0xff]
    %v84 = vld [vmem:[%s52 + $0x60] sm:$0xff]
    %v85 = vld [vmem:[%s52 + $0x68] sm:$0xff]
    %v86 = vld [vmem:[%s52 + $0x70] sm:$0xff]
    %v87 = vld [vmem:[%s52 + $0x78] sm:$0xff]
    %v88 = vld [vmem:[%s52 + $0x80] sm:$0xff]
    %v89 = vld [vmem:[%s52 + $0x88] sm:$0xff]
    %v90 = vld [vmem:[%s52 + $0x90] sm:$0xff]
    %v91 = vld [vmem:[%s52 + $0x98] sm:$0xff]
    %v92 = vld [vmem:[%s52 + $0xa0] sm:$0xff]
    %v93 = vld [vmem:[%s52 + $0xa8] sm:$0xff]
    %v94 = vld [vmem:[%s52 + $0xb0] sm:$0xff]
    %v95 = vld [vmem:[%s52 + $0xb8] sm:$0xff]
    %v96 = vld [vmem:[%s52 + $0xc0] sm:$0xff]
    %v97 = vld [vmem:[%s52 + $0xc8] sm:$0xff]
    %v98 = vld [vmem:[%s52 + $0xd0] sm:$0xff]
    %v99 = vld [vmem:[%s52 + $0xd8] sm:$0xff]
    %v100 = vld [vmem:[%s52 + $0xe0] sm:$0xff]
    %v101 = vld [vmem:[%s52 + $0xe8] sm:$0xff]
    %v102 = vld [vmem:[%s52 + $0xf0] sm:$0xff]
    %v103 = vld [vmem:[%s52 + $0xf8] sm:$0xff]
    %v104 = vld [vmem:[%s1] sm:$0xff]
    %v105 = vld [vmem:[%s1 + $0x8] sm:$0xff]
    %v106 = vld [vmem:[%s1 + $0x10] sm:$0xff]
    %v107 = vld [vmem:[%s1 + $0x18] sm:$0xff]
    %vm108 = vcmask 261120
    %v110 = vsel %vm108, %v72, 0
    %v113 = vsel %vm108, %v73, 0
    %v116 = vsel %vm108, %v74, 0
    %v119 = vsel %vm108, %v75, 0
    %v122 = vsel %vm108, %v76, 0
    %v125 = vsel %vm108, %v77, 0
    %v128 = vsel %vm108, %v78, 0
    %v131 = vsel %vm108, %v79, 0
    %v134 = vsel %vm108, %v80, 0
    %v137 = vsel %vm108, %v81, 0
    %v140 = vsel %vm108, %v82, 0
    %v143 = vsel %vm108, %v83, 0
    %v146 = vsel %vm108, %v84, 0
    %v149 = vsel %vm108, %v85, 0
    %v152 = vsel %vm108, %v86, 0
    %v155 = vsel %vm108, %v87, 0
    %v158 = vsel %vm108, %v88, 0
    %v161 = vsel %vm108, %v89, 0
    %v164 = vsel %vm108, %v90, 0
    %v167 = vsel %vm108, %v91, 0
    %v170 = vsel %vm108, %v92, 0
    %v173 = vsel %vm108, %v93, 0
    %v176 = vsel %vm108, %v94, 0
    %v179 = vsel %vm108, %v95, 0
    %v182 = vsel %vm108, %v96, 0
    %v185 = vsel %vm108, %v97, 0
    %v188 = vsel %vm108, %v98, 0
    %v191 = vsel %vm108, %v99, 0
    %v194 = vsel %vm108, %v100, 0
    %v197 = vsel %vm108, %v101, 0
    %v200 = vsel %vm108, %v102, 0
    %v203 = vsel %vm108, %v103, 0
    %205 = vmatprep.subr.mxu0 0.0
    %206 = vmatpush1.msra.mxu0 %v104
    %207 = vmatprep.subr.mxu0 0.0
    %208 = vmatpush1.msra.mxu0 %v105
    %209 = vmatprep.subr.mxu0 0.0
    %210 = vmatpush1.msra.mxu0 %v106
    %211 = vmatprep.subr.mxu0 0.0
    %212 = vmatpush1.msra.mxu0 %v107
    %213 = vmatprep.subr.mxu0 0.0
    %214 = vmatpush1.msra.mxu0 0.0
    %215 = vmatprep.subr.mxu0 0.0
    %216 = vmatpush1.msra.mxu0 0.0
    %217 = vmatprep.subr.mxu0 0.0
    %218 = vmatpush1.msra.mxu0 0.0
    %219 = vmatprep.subr.mxu0 0.0
    %220 = vmatpush1.msra.mxu0 0.0
    %221 = vmatprep.subr.mxu0 0.0
    %222 = vmatpush1.msra.mxu0 0.0
    %223 = vmatprep.subr.mxu0 0.0
    %224 = vmatpush1.msra.mxu0 0.0
    %225 = vmatprep.subr.mxu0 0.0
    %226 = vmatpush1.msra.mxu0 0.0
    %227 = vmatprep.subr.mxu0 0.0
    %228 = vmatpush1.msra.mxu0 0.0
    %229 = vmatprep.subr.mxu0 0.0
    %230 = vmatpush1.msra.mxu0 0.0
    %231 = vmatprep.subr.mxu0 0.0
    %232 = vmatpush1.msra.mxu0 0.0
    %233 = vmatprep.subr.mxu0 0.0
    %234 = vmatpush1.msra.mxu0 0.0
    %235 = vmatprep.subr.mxu0 0.0
    %236 = vmatpush1.msra.mxu0 0.0
    %237 = vmatprep.subr.mxu0 0.0
    %238 = vmatpush1.msra.mxu0 0.0
    %239 = vmatprep.subr.mxu0 0.0
    %240 = vmatpush1.msra.mxu0 0.0
    %241 = vmatprep.subr.mxu0 0.0
    %242 = vmatpush1.msra.mxu0 0.0
    %243 = vmatprep.subr.mxu0 0.0
    %244 = vmatpush1.msra.mxu0 0.0
    %245 = vmatprep.subr.mxu0 0.0
    %246 = vmatpush1.msra.mxu0 0.0
    %247 = vmatprep.subr.mxu0 0.0
    %248 = vmatpush1.msra.mxu0 0.0
    %249 = vmatprep.subr.mxu0 0.0
    %250 = vmatpush1.msra.mxu0 0.0
    %251 = vmatprep.subr.mxu0 0.0
    %252 = vmatpush1.msra.mxu0 0.0
    %253 = vmatprep.subr.mxu0 0.0
    %254 = vmatpush1.msra.mxu0 0.0
    %255 = vmatprep.subr.mxu0 0.0
    %256 = vmatpush1.msra.mxu0 0.0
    %257 = vmatprep.subr.mxu0 0.0
    %258 = vmatpush1.msra.mxu0 0.0
    %259 = vmatprep.subr.mxu0 0.0
    %260 = vmatpush1.msra.mxu0 0.0
    %261 = vmatprep.subr.mxu0 0.0
    %262 = vmatpush1.msra.mxu0 0.0
    %263 = vmatprep.subr.mxu0 0.0
    %264 = vmatpush1.msra.mxu0 0.0
    %265 = vmatprep.subr.mxu0 0.0
    %266 = vmatpush1.msra.mxu0 0.0
    %267 = vmatprep.subr.mxu0 0.0
    %268 = vmatpush1.msra.mxu0 0.0
    %269 = vmatprep.mubr.f32.mxu0 0.0
    %270 = vmatmul.mubr.f32.gmra.mrb[0].mxu0 %v110
    %v271 = vpop.f32.mrb[0].mxu0
    %v272 = vadd.f32 0.0, %v271
    %v273 = vpop.f32.mrb[0].mxu0
    %274 = vmatprep.mubr.f32.mxu0 0.0
    %275 = vmatmul.mubr.f32.gmra.mrb[0].mxu0 %v113
    %v276 = vpop.f32.mrb[0].mxu0
    %v277 = vadd.f32 0.0, %v276
    %v278 = vpop.f32.mrb[0].mxu0
    %279 = vmatprep.mubr.f32.mxu0 0.0
    %280 = vmatmul.mubr.f32.gmra.mrb[0].mxu0 %v116
    %v281 = vpop.f32.mrb[0].mxu0
    %v282 = vadd.f32 0.0, %v281
    %v283 = vpop.f32.mrb[0].mxu0
    %284 = vmatprep.mubr.f32.mxu0 0.0
    %285 = vmatmul.mubr.f32.gmra.mrb[0].mxu0 %v119
    %v286 = vpop.f32.mrb[0].mxu0
    %v287 = vadd.f32 0.0, %v286
    %v288 = vpop.f32.mrb[0].mxu0
    %289 = vmatprep.mubr.f32.mxu0 0.0
    %290 = vmatmul.mubr.f32.gmra.mrb[0].mxu0 %v122
    %v291 = vpop.f32.mrb[0].mxu0
    %v292 = vadd.f32 0.0, %v291
    %v293 = vpop.f32.mrb[0].mxu0
    %294 = vmatprep.mubr.f32.mxu0 0.0
    %295 = vmatmul.mubr.f32.gmra.mrb[0].mxu0 %v125
    %v296 = vpop.f32.mrb[0].mxu0
    %v297 = vadd.f32 0.0, %v296
    %v298 = vpop.f32.mrb[0].mxu0
    %299 = vmatprep.mubr.f32.mxu0 0.0
    %300 = vmatmul.mubr.f32.gmra.mrb[0].mxu0 %v128
    %v301 = vpop.f32.mrb[0].mxu0
    %v302 = vadd.f32 0.0, %v301
    %v303 = vpop.f32.mrb[0].mxu0
    %304 = vmatprep.mubr.f32.mxu0 0.0
    %305 = vmatmul.mubr.f32.gmra.mrb[0].mxu0 %v131
    %v306 = vpop.f32.mrb[0].mxu0
    %v307 = vadd.f32 0.0, %v306
    %v308 = vpop.f32.mrb[0].mxu0
    %309 = vmatprep.mubr.f32.mxu0 0.0
    %310 = vmatmul.mubr.f32.gmra.mrb[0].mxu0 %v134
    %v311 = vpop.f32.mrb[0].mxu0
    %v312 = vadd.f32 0.0, %v311
    %v313 = vpop.f32.mrb[0].mxu0
    %314 = vmatprep.mubr.f32.mxu0 0.0
    %315 = vmatmul.mubr.f32.gmra.mrb[0].mxu0 %v137
    %v316 = vpop.f32.mrb[0].mxu0
    %v317 = vadd.f32 0.0, %v316
    %v318 = vpop.f32.mrb[0].mxu0
    %319 = vmatprep.mubr.f32.mxu0 0.0
    %320 = vmatmul.mubr.f32.gmra.mrb[0].mxu0 %v140
    %v321 = vpop.f32.mrb[0].mxu0
    %v322 = vadd.f32 0.0, %v321
    %v323 = vpop.f32.mrb[0].mxu0
    %324 = vmatprep.mubr.f32.mxu0 0.0
    %325 = vmatmul.mubr.f32.gmra.mrb[0].mxu0 %v143
    %v326 = vpop.f32.mrb[0].mxu0
    %v327 = vadd.f32 0.0, %v326
    %v328 = vpop.f32.mrb[0].mxu0
    %329 = vmatprep.mubr.f32.mxu0 0.0
    %330 = vmatmul.mubr.f32.gmra.mrb[0].mxu0 %v146
    %v331 = vpop.f32.mrb[0].mxu0
    %v332 = vadd.f32 0.0, %v331
    %v333 = vpop.f32.mrb[0].mxu0
    %334 = vmatprep.mubr.f32.mxu0 0.0
    %335 = vmatmul.mubr.f32.gmra.mrb[0].mxu0 %v149
    %v336 = vpop.f32.mrb[0].mxu0
    %v337 = vadd.f32 0.0, %v336
    %v338 = vpop.f32.mrb[0].mxu0
    %339 = vmatprep.mubr.f32.mxu0 0.0
    %340 = vmatmul.mubr.f32.gmra.mrb[0].mxu0 %v152
    %v341 = vpop.f32.mrb[0].mxu0
    %v342 = vadd.f32 0.0, %v341
    %v343 = vpop.f32.mrb[0].mxu0
    %344 = vmatprep.mubr.f32.mxu0 0.0
    %345 = vmatmul.mubr.f32.gmra.mrb[0].mxu0 %v155
    %v346 = vpop.f32.mrb[0].mxu0
    %v347 = vadd.f32 0.0, %v346
    %v348 = vpop.f32.mrb[0].mxu0
    %349 = vmatprep.mubr.f32.mxu0 0.0
    %350 = vmatmul.mubr.f32.gmra.mrb[0].mxu0 %v158
    %v351 = vpop.f32.mrb[0].mxu0
    %v352 = vadd.f32 0.0, %v351
    %v353 = vpop.f32.mrb[0].mxu0
    %354 = vmatprep.mubr.f32.mxu0 0.0
    %355 = vmatmul.mubr.f32.gmra.mrb[0].mxu0 %v161
    %v356 = vpop.f32.mrb[0].mxu0
    %v357 = vadd.f32 0.0, %v356
    %v358 = vpop.f32.mrb[0].mxu0
    %359 = vmatprep.mubr.f32.mxu0 0.0
    %360 = vmatmul.mubr.f32.gmra.mrb[0].mxu0 %v164
    %v361 = vpop.f32.mrb[0].mxu0
    %v362 = vadd.f32 0.0, %v361
    %v363 = vpop.f32.mrb[0].mxu0
    %364 = vmatprep.mubr.f32.mxu0 0.0
    %365 = vmatmul.mubr.f32.gmra.mrb[0].mxu0 %v167
    %v366 = vpop.f32.mrb[0].mxu0
    %v367 = vadd.f32 0.0, %v366
    %v368 = vpop.f32.mrb[0].mxu0
    %369 = vmatprep.mubr.f32.mxu0 0.0
    %370 = vmatmul.mubr.f32.gmra.mrb[0].mxu0 %v170
    %v371 = vpop.f32.mrb[0].mxu0
    %v372 = vadd.f32 0.0, %v371
    %v373 = vpop.f32.mrb[0].mxu0
    %374 = vmatprep.mubr.f32.mxu0 0.0
    %375 = vmatmul.mubr.f32.gmra.mrb[0].mxu0 %v173
    %v376 = vpop.f32.mrb[0].mxu0
    %v377 = vadd.f32 0.0, %v376
    %v378 = vpop.f32.mrb[0].mxu0
    %379 = vmatprep.mubr.f32.mxu0 0.0
    %380 = vmatmul.mubr.f32.gmra.mrb[0].mxu0 %v176
    %v381 = vpop.f32.mrb[0].mxu0
    %v382 = vadd.f32 0.0, %v381
    %v383 = vpop.f32.mrb[0].mxu0
    %384 = vmatprep.mubr.f32.mxu0 0.0
    %385 = vmatmul.mubr.f32.gmra.mrb[0].mxu0 %v179
    %v386 = vpop.f32.mrb[0].mxu0
    %v387 = vadd.f32 0.0, %v386
    %v388 = vpop.f32.mrb[0].mxu0
    %389 = vmatprep.mubr.f32.mxu0 0.0
    %390 = vmatmul.mubr.f32.gmra.mrb[0].mxu0 %v182
    %v391 = vpop.f32.mrb[0].mxu0
    %v392 = vadd.f32 0.0, %v391
    %v393 = vpop.f32.mrb[0].mxu0
    %394 = vmatprep.mubr.f32.mxu0 0.0
    %395 = vmatmul.mubr.f32.gmra.mrb[0].mxu0 %v185
    %v396 = vpop.f32.mrb[0].mxu0
    %v397 = vadd.f32 0.0, %v396
    %v398 = vpop.f32.mrb[0].mxu0
    %399 = vmatprep.mubr.f32.mxu0 0.0
    %400 = vmatmul.mubr.f32.gmra.mrb[0].mxu0 %v188
    %v401 = vpop.f32.mrb[0].mxu0
    %v402 = vadd.f32 0.0, %v401
    %v403 = vpop.f32.mrb[0].mxu0
    %404 = vmatprep.mubr.f32.mxu0 0.0
    %405 = vmatmul.mubr.f32.gmra.mrb[0].mxu0 %v191
    %v406 = vpop.f32.mrb[0].mxu0
    %v407 = vadd.f32 0.0, %v406
    %v408 = vpop.f32.mrb[0].mxu0
    %409 = vmatprep.mubr.f32.mxu0 0.0
    %410 = vmatmul.mubr.f32.gmra.mrb[0].mxu0 %v194
    %v411 = vpop.f32.mrb[0].mxu0
    %v412 = vadd.f32 0.0, %v411
    %v413 = vpop.f32.mrb[0].mxu0
    %414 = vmatprep.mubr.f32.mxu0 0.0
    %415 = vmatmul.mubr.f32.gmra.mrb[0].mxu0 %v197
    %v416 = vpop.f32.mrb[0].mxu0
    %v417 = vadd.f32 0.0, %v416
    %v418 = vpop.f32.mrb[0].mxu0
    %419 = vmatprep.mubr.f32.mxu0 0.0
    %420 = vmatmul.mubr.f32.gmra.mrb[0].mxu0 %v200
    %v421 = vpop.f32.mrb[0].mxu0
    %v422 = vadd.f32 0.0, %v421
    %v423 = vpop.f32.mrb[0].mxu0
    %424 = vmatprep.mubr.f32.mxu0 0.0
    %425 = vmatmul.mubr.f32.gmra.mrb[0].mxu0 %v203
    %v426 = vpop.f32.mrb[0].mxu0
    %v427 = vadd.f32 0.0, %v426
    %v428 = vpop.f32.mrb[0].mxu0
    %429 = vdwg.mxu0
    %v430 = vld [vmem:[%s60] sm:$0xff]
    %v431 = vld [vmem:[%s60 + $0x8] sm:$0xff]
    %v432 = vld [vmem:[%s60 + $0x10] sm:$0xff]
    %v433 = vld [vmem:[%s60 + $0x18] sm:$0xff]
    %v434 = vld [vmem:[%s60 + $0x20] sm:$0xff]
    %v435 = vld [vmem:[%s60 + $0x28] sm:$0xff]
    %v436 = vld [vmem:[%s60 + $0x30] sm:$0xff]
    %v437 = vld [vmem:[%s60 + $0x38] sm:$0xff]
    %v438 = vld [vmem:[%s60 + $0x40] sm:$0xff]
    %v439 = vld [vmem:[%s60 + $0x48] sm:$0xff]
    %v440 = vld [vmem:[%s60 + $0x50] sm:$0xff]
    %v441 = vld [vmem:[%s60 + $0x58] sm:$0xff]
    %v442 = vld [vmem:[%s60 + $0x60] sm:$0xff]
    %v443 = vld [vmem:[%s60 + $0x68] sm:$0xff]
    %v444 = vld [vmem:[%s60 + $0x70] sm:$0xff]
    %v445 = vld [vmem:[%s60 + $0x78] sm:$0xff]
    %v446 = vld [vmem:[%s60 + $0x80] sm:$0xff]
    %v447 = vld [vmem:[%s60 + $0x88] sm:$0xff]
    %v448 = vld [vmem:[%s60 + $0x90] sm:$0xff]
    %v449 = vld [vmem:[%s60 + $0x98] sm:$0xff]
    %v450 = vld [vmem:[%s60 + $0xa0] sm:$0xff]
    %v451 = vld [vmem:[%s60 + $0xa8] sm:$0xff]
    %v452 = vld [vmem:[%s60 + $0xb0] sm:$0xff]
    %v453 = vld [vmem:[%s60 + $0xb8] sm:$0xff]
    %v454 = vld [vmem:[%s60 + $0xc0] sm:$0xff]
    %v455 = vld [vmem:[%s60 + $0xc8] sm:$0xff]
    %v456 = vld [vmem:[%s60 + $0xd0] sm:$0xff]
    %v457 = vld [vmem:[%s60 + $0xd8] sm:$0xff]
    %v458 = vld [vmem:[%s60 + $0xe0] sm:$0xff]
    %v459 = vld [vmem:[%s60 + $0xe8] sm:$0xff]
    %v460 = vld [vmem:[%s60 + $0xf0] sm:$0xff]
    %v461 = vld [vmem:[%s60 + $0xf8] sm:$0xff]
    %v462 = vadd.f32 %v272, %v430
    %v463 = vadd.f32 %v277, %v431
    %v464 = vadd.f32 %v282, %v432
    %v465 = vadd.f32 %v287, %v433
    %v466 = vadd.f32 %v292, %v434
    %v467 = vadd.f32 %v297, %v435
    %v468 = vadd.f32 %v302, %v436
    %v469 = vadd.f32 %v307, %v437
    %v470 = vadd.f32 %v312, %v438
    %v471 = vadd.f32 %v317, %v439
    %v472 = vadd.f32 %v322, %v440
    %v473 = vadd.f32 %v327, %v441
    %v474 = vadd.f32 %v332, %v442
    %v475 = vadd.f32 %v337, %v443
    %v476 = vadd.f32 %v342, %v444
    %v477 = vadd.f32 %v347, %v445
    %v478 = vadd.f32 %v352, %v446
    %v479 = vadd.f32 %v357, %v447
    %v480 = vadd.f32 %v362, %v448
    %v481 = vadd.f32 %v367, %v449
    %v482 = vadd.f32 %v372, %v450
    %v483 = vadd.f32 %v377, %v451
    %v484 = vadd.f32 %v382, %v452
    %v485 = vadd.f32 %v387, %v453
    %v486 = vadd.f32 %v392, %v454
    %v487 = vadd.f32 %v397, %v455
    %v488 = vadd.f32 %v402, %v456
    %v489 = vadd.f32 %v407, %v457
    %v490 = vadd.f32 %v412, %v458
    %v491 = vadd.f32 %v417, %v459
    %v492 = vadd.f32 %v422, %v460
    %v493 = vadd.f32 %v427, %v461
    %v494 = vld [vmem:[#allocation2] sm:$0x1]
    %vm495 = vcmask 7168
    %v496 = vsel %vm495, %v462, -inf
    %v497 = vsel %vm495, %v463, -inf
    %v498 = vsel %vm495, %v464, -inf
    %v499 = vsel %vm495, %v465, -inf
    %v500 = vsel %vm495, %v466, -inf
    %v501 = vmax.f32 %v496, %v500
    %v502 = vsel %vm495, %v467, -inf
    %v503 = vmax.f32 %v497, %v502
    %v504 = vsel %vm495, %v468, -inf
    %v505 = vmax.f32 %v498, %v504
    %v506 = vsel %vm495, %v469, -inf
    %v507 = vmax.f32 %v499, %v506
    %v508 = vsel %vm495, %v470, -inf
    %v509 = vmax.f32 %v501, %v508
    %v510 = vsel %vm495, %v471, -inf
    %v511 = vmax.f32 %v503, %v510
    %v512 = vsel %vm495, %v472, -inf
    %v513 = vmax.f32 %v505, %v512
    %v514 = vsel %vm495, %v473, -inf
    %v515 = vmax.f32 %v507, %v514
    %v516 = vsel %vm495, %v474, -inf
    %v517 = vmax.f32 %v509, %v516
    %v518 = vsel %vm495, %v475, -inf
    %v519 = vmax.f32 %v511, %v518
    %v520 = vsel %vm495, %v476, -inf
    %v521 = vmax.f32 %v513, %v520
    %v522 = vsel %vm495, %v477, -inf
    %v523 = vmax.f32 %v515, %v522
    %v524 = vsel %vm495, %v478, -inf
    %v525 = vmax.f32 %v517, %v524
    %v526 = vsel %vm495, %v479, -inf
    %v527 = vmax.f32 %v519, %v526
    %v528 = vsel %vm495, %v480, -inf
    %v529 = vmax.f32 %v521, %v528
    %v530 = vsel %vm495, %v481, -inf
    %v531 = vmax.f32 %v523, %v530
    %v532 = vsel %vm495, %v482, -inf
    %v533 = vmax.f32 %v525, %v532
    %v534 = vsel %vm495, %v483, -inf
    %v535 = vmax.f32 %v527, %v534
    %v536 = vsel %vm495, %v484, -inf
    %v537 = vmax.f32 %v529, %v536
    %v538 = vsel %vm495, %v485, -inf
    %v539 = vmax.f32 %v531, %v538
    %v540 = vsel %vm495, %v486, -inf
    %v541 = vmax.f32 %v533, %v540
    %v542 = vsel %vm495, %v487, -inf
    %v543 = vmax.f32 %v535, %v542
    %v544 = vsel %vm495, %v488, -inf
    %v545 = vmax.f32 %v537, %v544
    %v546 = vsel %vm495, %v489, -inf
    %v547 = vmax.f32 %v539, %v546
    %v548 = vsel %vm495, %v490, -inf
    %v549 = vmax.f32 %v541, %v548
    %v550 = vsel %vm495, %v491, -inf
    %v551 = vmax.f32 %v543, %v550
    %v552 = vsel %vm495, %v492, -inf
    %v553 = vmax.f32 %v545, %v552
    %v554 = vsel %vm495, %v493, -inf
    %v555 = vmax.f32 %v547, %v554
    %v556 = vmax.f32 %v549, %v551
    %v557 = vmax.f32 %v553, %v555
    %v558 = vmax.f32 %v556, %v557
    %559 = vmax.xlane.f32.xlu0 %v558
    %v560 = vpop.xlane.xlu0 %559
    %v561 = vrot.slane %v560, 4
    %v562 = vmax.f32 %v560, %v561
    %v563 = vrot.slane %v562, 2
    %v564 = vmax.f32 %v562, %v563
    %v565 = vrot.slane %v564, 1
    %v566 = vmax.f32 %v564, %v565
    %s567 = vtos %v566
    %v568 = vstv %s567
    %v569 = vmax.f32 %v494, %v568
    %v570 = vsub.f32 %v494, %v569
    %v571 = vmul.f32 %v570, 1.442695
    %v572 = vpow.pop %v571
    %v574 = vlaneseq
    %v575 = vshrl.u32 %v574, 7
    %v576 = vsub.s32 0, %v575
    %v577 = vrot.slane %v569, %v576
    %v579 = vsub.f32 %v462, %v577
    %v580 = vsub.f32 %v463, %v577
    %v581 = vsub.f32 %v464, %v577
    %v582 = vsub.f32 %v465, %v577
    %v583 = vsub.f32 %v466, %v577
    %v584 = vsub.f32 %v467, %v577
    %v585 = vsub.f32 %v468, %v577
    %v586 = vsub.f32 %v469, %v577
    %v587 = vsub.f32 %v470, %v577
    %v588 = vsub.f32 %v471, %v577
    %v589 = vsub.f32 %v472, %v577
    %v590 = vsub.f32 %v473, %v577
    %v591 = vsub.f32 %v474, %v577
    %v592 = vsub.f32 %v475, %v577
    %v593 = vsub.f32 %v476, %v577
    %v594 = vsub.f32 %v477, %v577
    %v595 = vsub.f32 %v478, %v577
    %v596 = vsub.f32 %v479, %v577
    %v597 = vsub.f32 %v480, %v577
    %v598 = vsub.f32 %v481, %v577
    %v599 = vsub.f32 %v482, %v577
    %v600 = vsub.f32 %v483, %v577
    %v601 = vsub.f32 %v484, %v577
    %v602 = vsub.f32 %v485, %v577
    %v603 = vsub.f32 %v486, %v577
    %v604 = vsub.f32 %v487, %v577
    %v605 = vsub.f32 %v488, %v577
    %v606 = vsub.f32 %v489, %v577
    %v607 = vsub.f32 %v490, %v577
    %v608 = vsub.f32 %v491, %v577
    %v609 = vsub.f32 %v492, %v577
    %v610 = vsub.f32 %v493, %v577
    %v611 = vmul.f32 %v579, 1.442695
    %v612 = vpow.pop %v611
    %v613 = vmul.f32 %v580, 1.442695
    %v614 = vpow.pop %v613
    %v615 = vmul.f32 %v581, 1.442695
    %v616 = vpow.pop %v615
    %v617 = vmul.f32 %v582, 1.442695
    %v618 = vpow.pop %v617
    %v619 = vmul.f32 %v583, 1.442695
    %v620 = vpow.pop %v619
    %v621 = vmul.f32 %v584, 1.442695
    %v622 = vpow.pop %v621
    %v623 = vmul.f32 %v585, 1.442695
    %v624 = vpow.pop %v623
    %v625 = vmul.f32 %v586, 1.442695
    %v626 = vpow.pop %v625
    %v627 = vmul.f32 %v587, 1.442695
    %v628 = vpow.pop %v627
    %v629 = vmul.f32 %v588, 1.442695
    %v630 = vpow.pop %v629
    %v631 = vmul.f32 %v589, 1.442695
    %v632 = vpow.pop %v631
    %v633 = vmul.f32 %v590, 1.442695
    %v634 = vpow.pop %v633
    %v635 = vmul.f32 %v591, 1.442695
    %v636 = vpow.pop %v635
    %v637 = vmul.f32 %v592, 1.442695
    %v638 = vpow.pop %v637
    %v639 = vmul.f32 %v593, 1.442695
    %v640 = vpow.pop %v639
    %v641 = vmul.f32 %v594, 1.442695
    %v642 = vpow.pop %v641
    %v643 = vmul.f32 %v595, 1.442695
    %v644 = vpow.pop %v643
    %v645 = vmul.f32 %v596, 1.442695
    %v646 = vpow.pop %v645
    %v647 = vmul.f32 %v597, 1.442695
    %v648 = vpow.pop %v647
    %v649 = vmul.f32 %v598, 1.442695
    %v650 = vpow.pop %v649
    %v651 = vmul.f32 %v599, 1.442695
    %v652 = vpow.pop %v651
    %v653 = vmul.f32 %v600, 1.442695
    %v654 = vpow.pop %v653
    %v655 = vmul.f32 %v601, 1.442695
    %v656 = vpow.pop %v655
    %v657 = vmul.f32 %v602, 1.442695
    %v658 = vpow.pop %v657
    %v659 = vmul.f32 %v603, 1.442695
    %v660 = vpow.pop %v659
    %v661 = vmul.f32 %v604, 1.442695
    %v662 = vpow.pop %v661
    %v663 = vmul.f32 %v605, 1.442695
    %v664 = vpow.pop %v663
    %v665 = vmul.f32 %v606, 1.442695
    %v666 = vpow.pop %v665
    %v667 = vmul.f32 %v607, 1.442695
    %v668 = vpow.pop %v667
    %v669 = vmul.f32 %v608, 1.442695
    %v670 = vpow.pop %v669
    %v671 = vmul.f32 %v609, 1.442695
    %v672 = vpow.pop %v671
    %v673 = vmul.f32 %v610, 1.442695
    %v674 = vpow.pop %v673
    %v675 = vld [vmem:[#allocation3] sm:$0x1]
    %v676 = vmul.f32 %v572, %v675
    %v677 = vsel %vm495, %v612, 0.0
    %v678 = vsel %vm495, %v614, 0.0
    %v679 = vadd.f32 %v677, %v678
    %v680 = vsel %vm495, %v616, 0.0
    %v681 = vadd.f32 %v679, %v680
    %v682 = vsel %vm495, %v618, 0.0
    %v683 = vadd.f32 %v681, %v682
    %v684 = vsel %vm495, %v620, 0.0
    %v685 = vadd.f32 %v683, %v684
    %v686 = vsel %vm495, %v622, 0.0
    %v687 = vadd.f32 %v685, %v686
    %v688 = vsel %vm495, %v624, 0.0
    %v689 = vadd.f32 %v687, %v688
    %v690 = vsel %vm495, %v626, 0.0
    %v691 = vadd.f32 %v689, %v690
    %v692 = vsel %vm495, %v628, 0.0
    %v693 = vadd.f32 %v691, %v692
    %v694 = vsel %vm495, %v630, 0.0
    %v695 = vadd.f32 %v693, %v694
    %v696 = vsel %vm495, %v632, 0.0
    %v697 = vadd.f32 %v695, %v696
    %v698 = vsel %vm495, %v634, 0.0
    %v699 = vadd.f32 %v697, %v698
    %v700 = vsel %vm495, %v636, 0.0
    %v701 = vadd.f32 %v699, %v700
    %v702 = vsel %vm495, %v638, 0.0
    %v703 = vadd.f32 %v701, %v702
    %v704 = vsel %vm495, %v640, 0.0
    %v705 = vadd.f32 %v703, %v704
    %v706 = vsel %vm495, %v642, 0.0
    %v707 = vadd.f32 %v705, %v706
    %v708 = vsel %vm495, %v644, 0.0
    %v709 = vadd.f32 %v707, %v708
    %v710 = vsel %vm495, %v646, 0.0
    %v711 = vadd.f32 %v709, %v710
    %v712 = vsel %vm495, %v648, 0.0
    %v713 = vadd.f32 %v711, %v712
    %v714 = vsel %vm495, %v650, 0.0
    %v715 = vadd.f32 %v713, %v714
    %v716 = vsel %vm495, %v652, 0.0
    %v717 = vadd.f32 %v715, %v716
    %v718 = vsel %vm495, %v654, 0.0
    %v719 = vadd.f32 %v717, %v718
    %v720 = vsel %vm495, %v656, 0.0
    %v721 = vadd.f32 %v719, %v720
    %v722 = vsel %vm495, %v658, 0.0
    %v723 = vadd.f32 %v721, %v722
    %v724 = vsel %vm495, %v660, 0.0
    %v725 = vadd.f32 %v723, %v724
    %v726 = vsel %vm495, %v662, 0.0
    %v727 = vadd.f32 %v725, %v726
    %v728 = vsel %vm495, %v664, 0.0
    %v729 = vadd.f32 %v727, %v728
    %v730 = vsel %vm495, %v666, 0.0
    %v731 = vadd.f32 %v729, %v730
    %v732 = vsel %vm495, %v668, 0.0
    %v733 = vadd.f32 %v731, %v732
    %v734 = vsel %vm495, %v670, 0.0
    %v735 = vadd.f32 %v733, %v734
    %v736 = vsel %vm495, %v672, 0.0
    %v737 = vadd.f32 %v735, %v736
    %v738 = vsel %vm495, %v674, 0.0
    %v739 = vadd.f32 %v737, %v738
    %740 = vadd.xlane.f32.xlu0 %v739
    %v741 = vpop.xlane.xlu0 %740
    %v742 = vrot.slane %v741, 4
    %v743 = vadd.f32 %v741, %v742
    %v744 = vrot.slane %v743, 2
    %v745 = vadd.f32 %v743, %v744
    %v746 = vrot.slane %v745, 1
    %v747 = vadd.f32 %v745, %v746
    %s748 = vtos %v747
    %v749 = vstv %s748
    %v750 = vadd.f32 %v676, %v749
    %vm751 = vcmask 0
    %752 = vst.msk [vmem:[#allocation3] sm:$0x1] %vm751, %v750
    %v753 = vld [vmem:[#allocation4] sm:$0x1]
    %755 = vset.pattern.permute.xlu0 0
    %756 = vperm.xlu0 %755, %v572
    %v757 = vpop.permute.xlu0 %756
    %v759 = vlaneseq
    %v760 = vshrl.u32 %v759, 7
    %v761 = vsub.s32 0, %v760
    %v762 = vrot.slane %v757, %v761
    %v763 = vmul.f32 %v762, %v753
    %764 = vxpose.xlu0.b32.start [1/16] %v612, 128
    %765 = vxpose.xlu0.b32.cont [2/16] %v614, 128
    %766 = vxpose.xlu0.b32.cont [3/16] %v616, 128
    %767 = vxpose.xlu0.b32.cont [4/16] %v618, 128
    %768 = vxpose.xlu0.b32.cont [5/16] %v620, 128
    %769 = vxpose.xlu0.b32.cont [6/16] %v622, 128
    %770 = vxpose.xlu0.b32.cont [7/16] %v624, 128
    %771 = vxpose.xlu0.b32.cont [8/16] %v626, 128
    %772 = vxpose.xlu0.b32.cont [9/16] %v628, 128
    %773 = vxpose.xlu0.b32.cont [10/16] %v630, 128
    %774 = vxpose.xlu0.b32.cont [11/16] %v632, 128
    %775 = vxpose.xlu0.b32.cont [12/16] %v634, 128
    %776 = vxpose.xlu0.b32.cont [13/16] %v636, 128
    %777 = vxpose.xlu0.b32.cont [14/16] %v638, 128
    %778 = vxpose.xlu0.b32.cont [15/16] %v640, 128
    %779 = vxpose.xlu0.b32.end [16/16] %v642, 128
    %v780 = vpop.trf.xlu0
    %v781 = vpop.trf.xlu0
    %v782 = vpop.trf.xlu0
    %v783 = vpop.trf.xlu0
    %v784 = vpop.trf.xlu0
    %v785 = vpop.trf.xlu0
    %v786 = vpop.trf.xlu0
    %v787 = vpop.trf.xlu0
    %v788 = vpop.trf.xlu0
    %v789 = vpop.trf.xlu0
    %v790 = vpop.trf.xlu0
    %v791 = vpop.trf.xlu0
    %v792 = vpop.trf.xlu0
    %v793 = vpop.trf.xlu0
    %v794 = vpop.trf.xlu0
    %v795 = vpop.trf.xlu0
    %796 = vxpose.xlu0.b32.start [1/16] %v644, 128
    %797 = vxpose.xlu0.b32.cont [2/16] %v646, 128
    %798 = vxpose.xlu0.b32.cont [3/16] %v648, 128
    %799 = vxpose.xlu0.b32.cont [4/16] %v650, 128
    %800 = vxpose.xlu0.b32.cont [5/16] %v652, 128
    %801 = vxpose.xlu0.b32.cont [6/16] %v654, 128
    %802 = vxpose.xlu0.b32.cont [7/16] %v656, 128
    %803 = vxpose.xlu0.b32.cont [8/16] %v658, 128
    %804 = vxpose.xlu0.b32.cont [9/16] %v660, 128
    %805 = vxpose.xlu0.b32.cont [10/16] %v662, 128
    %806 = vxpose.xlu0.b32.cont [11/16] %v664, 128
    %807 = vxpose.xlu0.b32.cont [12/16] %v666, 128
    %808 = vxpose.xlu0.b32.cont [13/16] %v668, 128
    %809 = vxpose.xlu0.b32.cont [14/16] %v670, 128
    %810 = vxpose.xlu0.b32.cont [15/16] %v672, 128
    %811 = vxpose.xlu0.b32.end [16/16] %v674, 128
    %v812 = vpop.trf.xlu0
    %v813 = vpop.trf.xlu0
    %v814 = vpop.trf.xlu0
    %v815 = vpop.trf.xlu0
    %v816 = vpop.trf.xlu0
    %v817 = vpop.trf.xlu0
    %v818 = vpop.trf.xlu0
    %v819 = vpop.trf.xlu0
    %v820 = vpop.trf.xlu0
    %v821 = vpop.trf.xlu0
    %v822 = vpop.trf.xlu0
    %v823 = vpop.trf.xlu0
    %v824 = vpop.trf.xlu0
    %v825 = vpop.trf.xlu0
    %v826 = vpop.trf.xlu0
    %v827 = vpop.trf.xlu0
    %828 = vmatprep.subr.mxu0 0.0
    %829 = vmatpush1.msra.mxu0 %v72
    %830 = vmatprep.subr.mxu0 0.0
    %831 = vmatpush1.msra.mxu0 %v73
    %832 = vmatprep.subr.mxu0 0.0
    %833 = vmatpush1.msra.mxu0 %v74
    %834 = vmatprep.subr.mxu0 0.0
    %835 = vmatpush1.msra.mxu0 %v75
    %836 = vmatprep.subr.mxu0 0.0
    %837 = vmatpush1.msra.mxu0 %v76
    %838 = vmatprep.subr.mxu0 0.0
    %839 = vmatpush1.msra.mxu0 %v77
    %840 = vmatprep.subr.mxu0 0.0
    %841 = vmatpush1.msra.mxu0 %v78
    %842 = vmatprep.subr.mxu0 0.0
    %843 = vmatpush1.msra.mxu0 %v79
    %844 = vmatprep.subr.mxu0 0.0
    %845 = vmatpush1.msra.mxu0 %v80
    %846 = vmatprep.subr.mxu0 0.0
    %847 = vmatpush1.msra.mxu0 %v81
    %848 = vmatprep.subr.mxu0 0.0
    %849 = vmatpush1.msra.mxu0 %v82
    %850 = vmatprep.subr.mxu0 0.0
    %851 = vmatpush1.msra.mxu0 %v83
    %852 = vmatprep.subr.mxu0 0.0
    %853 = vmatpush1.msra.mxu0 %v84
    %854 = vmatprep.subr.mxu0 0.0
    %855 = vmatpush1.msra.mxu0 %v85
    %856 = vmatprep.subr.mxu0 0.0
    %857 = vmatpush1.msra.mxu0 %v86
    %858 = vmatprep.subr.mxu0 0.0
    %859 = vmatpush1.msra.mxu0 %v87
    %860 = vmatprep.subr.mxu0 0.0
    %861 = vmatpush1.msra.mxu0 %v88
    %862 = vmatprep.subr.mxu0 0.0
    %863 = vmatpush1.msra.mxu0 %v89
    %864 = vmatprep.subr.mxu0 0.0
    %865 = vmatpush1.msra.mxu0 %v90
    %866 = vmatprep.subr.mxu0 0.0
    %867 = vmatpush1.msra.mxu0 %v91
    %868 = vmatprep.subr.mxu0 0.0
    %869 = vmatpush1.msra.mxu0 %v92
    %870 = vmatprep.subr.mxu0 0.0
    %871 = vmatpush1.msra.mxu0 %v93
    %872 = vmatprep.subr.mxu0 0.0
    %873 = vmatpush1.msra.mxu0 %v94
    %874 = vmatprep.subr.mxu0 0.0
    %875 = vmatpush1.msra.mxu0 %v95
    %876 = vmatprep.subr.mxu0 0.0
    %877 = vmatpush1.msra.mxu0 %v96
    %878 = vmatprep.subr.mxu0 0.0
    %879 = vmatpush1.msra.mxu0 %v97
    %880 = vmatprep.subr.mxu0 0.0
    %881 = vmatpush1.msra.mxu0 %v98
    %882 = vmatprep.subr.mxu0 0.0
    %883 = vmatpush1.msra.mxu0 %v99
    %884 = vmatprep.subr.mxu0 0.0
    %885 = vmatpush1.msra.mxu0 %v100
    %886 = vmatprep.subr.mxu0 0.0
    %887 = vmatpush1.msra.mxu0 %v101
    %888 = vmatprep.subr.mxu0 0.0
    %889 = vmatpush1.msra.mxu0 %v102
    %890 = vmatprep.subr.mxu0 0.0
    %891 = vmatpush1.msra.mxu0 %v103
    %892 = vmatprep.mubr.f32.mxu0 %v812
    %893 = vmatmul.mubr.f32.gmra.mrb[0].mxu0 %v780
    %v894 = vpop.f32.mrb[0].mxu0
    %v895 = vadd.f32 0.0, %v894
    %v896 = vpop.f32.mrb[0].mxu0
    %897 = vdwg.mxu0
    %v898 = vadd.f32 %v763, %v895
    %vm899 = vcmask 253952
    %900 = vst.msk [vmem:[#allocation4] sm:$0x1] %vm899, %v898
    %901 = vst.msk [vmem:[#allocation2] sm:$0x1] %vm751, %v569
    // Predicated region
    $region18: #{tpu_custom_call.1} parent=1 // pred_check
      %p902 = pneg %p63
    $region19: #{tpu_custom_call.1} parent=1 // pred_check_branch
      %904 = sbr.rel (%p902) target = $region21
    $region20: #{tpu_custom_call.1} parent=1 // pred_region
      %v905 = vld [vmem:[#allocation2] sm:$0x1]
      %906 = vst.msk [vmem:[#allocation5] sm:$0x1] %vm751, %v905
      %v907 = vld [vmem:[#allocation3] sm:$0x1]
      %908 = vst.msk [vmem:[#allocation7] sm:$0x1] %vm751, %v907
      %v909 = vld [vmem:[#allocation4] sm:$0x1]
      %910 = vst.msk [vmem:[#allocation9] sm:$0x1] %vm899, %v909
    $region21: #{tpu_custom_call.1} parent=1 // pred_fallthru
      _
    // Predicated region
    $region22: #{tpu_custom_call.1} parent=1 // pred_check
      _
    $region23: #{tpu_custom_call.1} parent=1 // pred_check_branch
      %912 = sbr.rel (0) target = $region25
    $region24: #{tpu_custom_call.1} parent=1 // pred_region
      %s914 = ssub.s32 16, 16
      %915 = vsyncadd [#allocation6], %s914
      %s917 = sshll.u32 [#allocation5], 4
      %s918 = int_to_ptr.vmem [resolvable:$true] %s917
      %920 = dma.vmem_to_hbm [thread:$0]  %s918, 16, %s3, [#allocation6]
    $region25: #{tpu_custom_call.1} parent=1 // pred_fallthru
      _
    // Predicated region
    $region26: #{tpu_custom_call.1} parent=1 // pred_check
      _
    $region27: #{tpu_custom_call.1} parent=1 // pred_check_branch
      %922 = sbr.rel (0) target = $region29
    $region28: #{tpu_custom_call.1} parent=1 // pred_region
      %s924 = ssub.s32 16, 16
      %925 = vsyncadd [#allocation8], %s924
      %s927 = sshll.u32 [#allocation7], 4
      %s928 = int_to_ptr.vmem [resolvable:$true] %s927
      %930 = dma.vmem_to_hbm [thread:$0]  %s928, 16, %s4, [#allocation8]
    $region29: #{tpu_custom_call.1} parent=1 // pred_fallthru
      _
    // Predicated region
    $region30: #{tpu_custom_call.1} parent=1 // pred_check
      _
    $region31: #{tpu_custom_call.1} parent=1 // pred_check_branch
      %932 = sbr.rel (0) target = $region33
    $region32: #{tpu_custom_call.1} parent=1 // pred_region
      %s934 = ssub.s32 16, 16
      %935 = vsyncadd [#allocation8], %s934
      %s937 = sshll.u32 [#allocation9], 4
      %s938 = int_to_ptr.vmem [resolvable:$true] %s937
      %940 = dma.vmem_to_hbm [thread:$0]  %s938, 16, %s5, [#allocation8]
    $region33: #{tpu_custom_call.1} parent=1 // pred_fallthru
      _
    // Predicated region
    $region34: #{tpu_custom_call.1} parent=1 // pred_check
      _
    $region35: #{tpu_custom_call.1} parent=1 // pred_check_branch
      %942 = sbr.rel (0) target = $region37
    $region36: #{tpu_custom_call.1} parent=1 // pred_region
      %943 = dma.done [#allocation6], 16
    $region37: #{tpu_custom_call.1} parent=1 // pred_fallthru
      _
    // Predicated region
    $region38: #{tpu_custom_call.1} parent=1 // pred_check
      _
    $region39: #{tpu_custom_call.1} parent=1 // pred_check_branch
      %945 = sbr.rel (0) target = $region41
    $region40: #{tpu_custom_call.1} parent=1 // pred_region
      %946 = dma.done [#allocation8], 16
    $region41: #{tpu_custom_call.1} parent=1 // pred_fallthru
      _
    // Predicated region
    $region42: #{tpu_custom_call.1} parent=1 // pred_check
      _
    $region43: #{tpu_custom_call.1} parent=1 // pred_check_branch
      %948 = sbr.rel (0) target = $region45
    $region44: #{tpu_custom_call.1} parent=1 // pred_region
      %949 = dma.done [#allocation8], 16
    $region45: #{tpu_custom_call.1} parent=1 // pred_fallthru
      _
    %950 = vsyncpa [#allocation6], 1
    %951 = vsyncpa [#allocation8], 1

</llo_original>
